<compile_context>
chip_gen: v7x
topology: tpu7x:2x2x1
jax: 0.10.0
libtpu: 0.0.40
codegen_flags: <defaults>
</compile_context>

<pallas_src>
import math
import functools

import jax
import jax.numpy as jnp
from jax.experimental import pallas as pl
from jax.experimental.pallas import tpu as pltpu


def _round_up(x, m):
    return (x + m - 1) // m * m


def _vmem_capacity_bytes():
    try:
        return int(pltpu.get_tpu_info().vmem_capacity_bytes)
    except Exception:
        return 128 << 20  # conservative default (v5e/v6e)


def _mdn_fused_kernel(num_mixtures, kz, approx_recip, h_ref, w_ref, b_ref, out_ref):
    """Fused affine + per-column-group post-processing for one row tile.

    Column layout of w / b / out (permuted, temperature-folded, padded in glue):
      [0, K)             : pi logits (already scaled by 1/T)
      [K, K+K*Z)         : mu
      [K+K*Z, K+2*K*Z)   : log_sigma (+ 0.5*log(T) folded into the bias)
      [K+2*K*Z, N_pad)   : zero padding
    """
    k = num_mixtures

    h = h_ref[...]
    if h.dtype != w_ref.dtype:          # in-kernel operand cast (no HBM copy of h)
        h = h.astype(w_ref.dtype)

    raw = jnp.dot(h, w_ref[...], preferred_element_type=jnp.float32)
    raw = raw + b_ref[...]              # bias is f32 (1, N_pad), broadcast add

    n_pad = out_ref.shape[-1]
    # Hoisted masks: built at (1, N_pad) and broadcast by the wheres.
    col = jax.lax.broadcasted_iota(jnp.int32, (1, n_pad), 1)
    is_pi = col < k
    is_sigma = (col >= k + kz) & (col < k + 2 * kz)

    # Row-wise max over the pi columns only (others masked to a large negative).
    masked_logits = jnp.where(is_pi, raw, jnp.float32(-1e30))
    row_max = jnp.max(masked_logits, axis=-1, keepdims=True)

    # One full-width exp serves both the softmax numerator (pi columns, shifted
    # by the row max) and sigma = exp(log_sigma) (sigma columns, unshifted).
    # NOTE: keep SELECTS (jnp.where), not mask*expv — mu/padding lanes may
    # overflow to inf and selects discard them without creating NaN.
    expv = jnp.exp(jnp.where(is_pi, raw - row_max, raw))

    num = jnp.where(is_pi, expv, 0.0)
    denom = jnp.sum(num, axis=-1, keepdims=True)
    pi_vals = num * pl.reciprocal(denom, approx=approx_recip)

    out = jnp.where(is_pi, pi_vals, jnp.where(is_sigma, expv, raw))
    out_ref[...] = out.astype(out_ref.dtype)


def pack_mdn_params(weight, bias, *, z_dim, num_mixtures, temperature=1.0,
                    compute_dtype=jnp.float32):
    """One-time parameter preprocessing (hoist out of the per-call path).

    weight : (param_dim, H) nn.Linear layout, param_dim = (2*Z+1)*K
    bias   : (param_dim,)
    Returns (w_fused (H, N_pad) in compute_dtype, b_fused (1, N_pad) f32, N_pad)
    with the temperature folded in.  bf16 compute_dtype is recommended on all
    generations (v5e/v6e/v7x MXUs are bf16-native; accumulation stays f32).
    """
    k, z = num_mixtures, z_dim
    group = 2 * z + 1
    param_dim, h_dim = weight.shape
    assert param_dim == k * group

    cols = jnp.arange(k * group).reshape(k, group)
    perm = jnp.concatenate([cols[:, 0],                     # pi
                            cols[:, 1:1 + z].reshape(-1),   # mu  (k-major, z-minor)
                            cols[:, 1 + z:].reshape(-1)])   # log_sigma

    w = weight.astype(jnp.float32)[perm].T                  # (H, N)
    b = bias.astype(jnp.float32)[perm]                      # (N,)

    n = k + 2 * k * z
    inv_t = 1.0 / float(temperature)
    col_scale = jnp.concatenate([jnp.full((k,), inv_t, jnp.float32),
                                 jnp.ones((2 * k * z,), jnp.float32)])
    b_shift = jnp.concatenate([jnp.zeros((k + k * z,), jnp.float32),
                               jnp.full((k * z,), 0.5 * math.log(float(temperature)),
                                        jnp.float32)])
    w = w * col_scale[None, :]
    b = b * col_scale + b_shift

    # Keep N_pad at the minimal multiple of 128 — this kernel is HBM-bound, so
    # padding further to "fill" the 256-wide MXU would only add store bytes.
    n_pad = _round_up(n, 128)
    w_fused = jnp.zeros((h_dim, n_pad), jnp.float32).at[:, :n].set(w)
    b_fused = jnp.zeros((1, n_pad), jnp.float32).at[:, :n].set(b)
    return w_fused.astype(compute_dtype), b_fused, n_pad


def mdn_output_packed(h, w_fused, b_fused, *, z_dim, num_mixtures,
                      out_dtype=jnp.float32, approx_softmax_recip=False,
                      return_packed=False, row_tile=None,
                      single_buffer_weights=None):
    """Run the fused MDN output layer given pre-packed parameters.

    return_packed=True returns the raw (B, T, N_pad) slab (columns
    [pi | mu | log-sigma-exp'd | zero-pad]) so the consumer can read it
    directly and skip the post-kernel column split (extra HBM round-trip).
    """
    b_sz, t_sz, h_dim = h.shape
    k, z = num_mixtures, z_dim
    kz = k * z
    n_pad = w_fused.shape[1]
    assert w_fused.shape[0] == h_dim and b_fused.shape == (1, n_pad)
    assert n_pad >= k + 2 * kz and n_pad % 128 == 0

    m = b_sz * t_sz
    h_flat = h.reshape(m, h_dim)        # no pad / no dtype copy of h in HBM

    h_item = jnp.dtype(h.dtype).itemsize
    w_item = jnp.dtype(w_fused.dtype).itemsize
    out_item = jnp.dtype(out_dtype).itemsize

    # ---- per-generation VMEM budget -------------------------------------
    cap_total = _vmem_capacity_bytes()
    # v7x: 64 MiB/TC -> stay well under; v5e/v6e: 128 MiB -> allow big tiles.
    budget = (40 << 20) if cap_total <= (80 << 20) else (96 << 20)

    # Conservative resident footprint (assume double-buffered weight/bias).
    w_resident = 2 * (h_dim * n_pad * w_item + n_pad * 4)

    # ---- adaptive row tile: ~8 MiB of double-buffered in/out per set ----
    per_row = h_dim * h_item + n_pad * out_item
    tile_budget = min(8 << 20, max(budget - w_resident - (4 << 20), 2 << 20))
    tm = int(tile_budget // (2 * per_row))
    tm = min(tm, 4096)
    if row_tile is not None:
        tm = min(tm, int(row_tile))
    if m >= 32:
        # >=2 grid tiles so ("parallel",) can split rows across v7x's 2 TCs.
        tm = min(tm, -(-m // 2))
    if tm >= m:
        tm = m                           # single full tile (block == full dim)
    else:
        tm = max(16, (tm // 16) * 16)    # multiple of 16: f32 & bf16 friendly
    grid = pl.cdiv(m, tm)                # ragged last tile (masked stores)

    vmem_limit = int(min(budget,
                         max(16 << 20,
                             int(1.5 * (w_resident + 2 * tm * per_row)) + (2 << 20))))

    kernel_fn = functools.partial(_mdn_fused_kernel, k, kz, approx_softmax_recip)

    def _run(single_buffer):
        spec_kw = {"pipeline_mode": pl.Buffered(1)} if single_buffer else {}
        return pl.pallas_call(
            kernel_fn,
            out_shape=jax.ShapeDtypeStruct((m, n_pad), out_dtype),
            grid_spec=pltpu.PrefetchScalarGridSpec(
                num_scalar_prefetch=0,
                grid=(grid,),
                in_specs=[
                    pl.BlockSpec((tm, h_dim), lambda i: (i, 0)),              # streamed h tile
                    pl.BlockSpec((h_dim, n_pad), lambda i: (0, 0), **spec_kw),  # resident weight
                    pl.BlockSpec((1, n_pad), lambda i: (0, 0), **spec_kw),      # resident bias
                ],
                out_specs=pl.BlockSpec((tm, n_pad), lambda i: (i, 0)),
            ),
            compiler_params=pltpu.CompilerParams(
                dimension_semantics=("parallel",),   # v7x: shard row tiles over 2 TCs
                vmem_limit_bytes=vmem_limit,
            ),
        )(h_flat, w_fused, b_fused)

    if single_buffer_weights is None:
        try:
            out = _run(True)     # free half the resident-weight VMEM (v7x)
        except Exception:
            out = _run(False)    # fallback if Buffered(1) unsupported
    else:
        out = _run(bool(single_buffer_weights))

    if return_packed:
        return out.reshape(b_sz, t_sz, n_pad)

    # Post-kernel column split kept only for PyTorch-API parity; prefer
    # return_packed=True (or fuse the split into the consumer) to avoid the
    # extra HBM round-trip over the slab.
    pi = out[:, :k].reshape(b_sz, t_sz, k)
    mu = out[:, k:k + kz].reshape(b_sz, t_sz, k, z)
    sigma = out[:, k + kz:k + 2 * kz].reshape(b_sz, t_sz, k, z)
    return pi, mu, sigma


def mdn_output(h, weight, bias, *, z_dim, num_mixtures, temperature=1.0,
               compute_dtype=jnp.float32, **kwargs):
    """Convenience wrapper: pack params then run (prefer packing once outside)."""
    w_fused, b_fused, _ = pack_mdn_params(
        weight, bias, z_dim=z_dim, num_mixtures=num_mixtures,
        temperature=temperature, compute_dtype=compute_dtype)
    return mdn_output_packed(h, w_fused, b_fused, z_dim=z_dim,
                             num_mixtures=num_mixtures, **kwargs)


def _reference(h, weight, bias, *, z_dim, num_mixtures, temperature=1.0):
    """Pure-JAX reference mirroring the PyTorch forward exactly."""
    B, T, _ = h.shape
    K, Z = num_mixtures, z_dim
    out = jnp.einsum("bth,ph->btp", h, weight) + bias
    out = out.reshape(B, T, K, 2 * Z + 1)
    pi = jax.nn.softmax(out[..., 0] / temperature, axis=-1)
    mu = out[..., 1:1 + Z]
    sigma = jnp.exp(out[..., 1 + Z:1 + 2 * Z]) * math.sqrt(temperature)
    return pi, mu, sigma


if __name__ == "__main__":
    # Small shapes consistent with the module: h is (batch, seq, hidden_dim).
    B, T, H = 2, 8, 32
    Z, K = 8, 5
    param_dim = (2 * Z + 1) * K          # 85 -> N_pad = 128
    temperature = 0.8

    key = jax.random.PRNGKey(0)
    kh, kw, kb, kh2 = jax.random.split(key, 4)
    h = jax.random.normal(kh, (B, T, H), dtype=jnp.float32)
    # Deterministic init mimicking nn.Linear default: U(-1/sqrt(H), 1/sqrt(H)).
    bound = 1.0 / math.sqrt(H)
    weight = jax.random.uniform(kw, (param_dim, H), jnp.float32, -bound, bound)
    bias = jax.random.uniform(kb, (param_dim,), jnp.float32, -bound, bound)

    pi_r, mu_r, sig_r = _reference(h, weight, bias, z_dim=Z, num_mixtures=K,
                                   temperature=temperature)

    # --- f32 path (default, exact softmax normalization) --------------------
    w_f32, b_f32, n_pad = pack_mdn_params(weight, bias, z_dim=Z, num_mixtures=K,
                                          temperature=temperature)   # packed ONCE
    pi, mu, sigma = mdn_output_packed(h, w_f32, b_f32, z_dim=Z, num_mixtures=K)
    jax.block_until_ready((pi, mu, sigma))
    assert pi.shape == (B, T, K) and mu.shape == (B, T, K, Z) and sigma.shape == (B, T, K, Z)
    assert jnp.allclose(pi, pi_r, atol=1e-4, rtol=1e-4)
    assert jnp.allclose(jnp.sum(pi, axis=-1), 1.0, atol=1e-4)
    assert jnp.allclose(mu, mu_r, atol=1e-4, rtol=1e-4)
    assert jnp.allclose(sigma, sig_r, atol=1e-4, rtol=1e-4)

    # --- packed-slab API (skips the post-kernel column split) ---------------
    slab = mdn_output_packed(h, w_f32, b_f32, z_dim=Z, num_mixtures=K,
                             return_packed=True)
    jax.block_until_ready(slab)
    assert slab.shape == (B, T, n_pad)
    assert jnp.allclose(slab[..., :K], pi_r, atol=1e-4, rtol=1e-4)

    # --- ragged multi-tile path (m = 51: several tiles + masked last tile) --
    B2, T2 = 3, 17
    h2 = jax.random.normal(kh2, (B2, T2, H), dtype=jnp.float32)
    pi2, mu2, sig2 = mdn_output_packed(h2, w_f32, b_f32, z_dim=Z, num_mixtures=K)
    pi2_r, mu2_r, sig2_r = _reference(h2, weight, bias, z_dim=Z, num_mixtures=K,
                                      temperature=temperature)
    jax.block_until_ready((pi2, mu2, sig2))
    assert jnp.allclose(pi2, pi2_r, atol=1e-4, rtol=1e-4)
    assert jnp.allclose(mu2, mu2_r, atol=1e-4, rtol=1e-4)
    assert jnp.allclose(sig2, sig2_r, atol=1e-4, rtol=1e-4)

    # --- bf16 matmul operands + bf16 output slab (all generations) ----------
    w_bf, b_bf, _ = pack_mdn_params(weight, bias, z_dim=Z, num_mixtures=K,
                                    temperature=temperature,
                                    compute_dtype=jnp.bfloat16)
    pi_b, mu_b, sig_b = mdn_output_packed(h, w_bf, b_bf, z_dim=Z, num_mixtures=K,
                                          out_dtype=jnp.bfloat16)
    jax.block_until_ready((pi_b, mu_b, sig_b))
    assert jnp.allclose(pi_b.astype(jnp.float32), pi_r, atol=5e-2, rtol=5e-2)
    assert jnp.allclose(mu_b.astype(jnp.float32), mu_r, atol=5e-2, rtol=5e-2)
    assert jnp.allclose(sig_b.astype(jnp.float32), sig_r, atol=5e-2, rtol=5e-2)

    print("KERNEL_OK")
</pallas_src>

<mosaic_0001>
module attributes {stable_mosaic.version = 11 : i64} {
  func.func @_mdn_fused_kernel(%arg0: i32, %arg1: memref<16x32xf32, #tpu.memory_space<vmem>>, %arg2: memref<32x128xf32, #tpu.memory_space<vmem>>, %arg3: memref<1x128xf32, #tpu.memory_space<vmem>>, %arg4: memref<16x128xf32, #tpu.memory_space<vmem>>) attributes {dimension_semantics = [#tpu.dimension_semantics<parallel>], iteration_bounds = array<i64: 1>, scalar_prefetch = 0 : i64, scratch_operands = 0 : i64, tpu.core_type = #tpu.core_type<tc>, window_params = [{transform_indices = @transform_0, window_bounds = array<i64: 16, 32>}, {pipeline_mode = #tpu.pipeline_mode<synchronous>, transform_indices = @transform_1, window_bounds = array<i64: 32, 128>}, {pipeline_mode = #tpu.pipeline_mode<synchronous>, transform_indices = @transform_2, window_bounds = array<i64: 1, 128>}, {transform_indices = @transform_3, window_bounds = array<i64: 16, 128>}]} {
    %c0 = arith.constant 0 : index
    %c0_0 = arith.constant 0 : index
    %0 = vector.load %arg1[%c0, %c0_0] : memref<16x32xf32, #tpu.memory_space<vmem>>, vector<16x32xf32>
    %c0_1 = arith.constant 0 : index
    %c0_2 = arith.constant 0 : index
    %1 = vector.load %arg2[%c0_1, %c0_2] : memref<32x128xf32, #tpu.memory_space<vmem>>, vector<32x128xf32>
    %cst = arith.constant dense<0.000000e+00> : vector<16x128xf32>
    %2 = tpu.matmul %0, %1, %cst {dimension_numbers = #tpu.dot_dimension_numbers<[1], [0], [0], [1], [0, 0, 1, 1], [], []>} : vector<16x32xf32>, vector<32x128xf32>, vector<16x128xf32> -> vector<16x128xf32>
    %c0_3 = arith.constant 0 : index
    %c0_4 = arith.constant 0 : index
    %3 = vector.load %arg3[%c0_3, %c0_4] : memref<1x128xf32, #tpu.memory_space<vmem>>, vector<1x128xf32>
    %4 = vector.broadcast %3 : vector<1x128xf32> to vector<16x128xf32>
    %5 = arith.addf %2, %4 : vector<16x128xf32>
    %6 = tpu.iota {dimensions = array<i32: 1>} : vector<1x128xi32>
    %c5_i32 = arith.constant 5 : i32
    %7 = vector.broadcast %c5_i32 : i32 to vector<1x128xi32>
    %8 = arith.cmpi slt, %6, %7 : vector<1x128xi32>
    %c45_i32 = arith.constant 45 : i32
    %9 = vector.broadcast %c45_i32 : i32 to vector<1x128xi32>
    %10 = arith.cmpi sge, %6, %9 : vector<1x128xi32>
    %c85_i32 = arith.constant 85 : i32
    %11 = vector.broadcast %c85_i32 : i32 to vector<1x128xi32>
    %12 = arith.cmpi slt, %6, %11 : vector<1x128xi32>
    %13 = arith.andi %10, %12 : vector<1x128xi1>
    %cst_5 = arith.constant -1.000000e+30 : f32
    %14 = vector.shape_cast %8 : vector<1x128xi1> to vector<1x128xi1>
    %15 = vector.broadcast %14 : vector<1x128xi1> to vector<16x128xi1>
    %16 = vector.broadcast %cst_5 : f32 to vector<16x128xf32>
    %17 = arith.select %15, %5, %16 : vector<16x128xi1>, vector<16x128xf32>
    %cst_6 = arith.constant dense<0xFF800000> : vector<16xf32>
    %18 = vector.multi_reduction <maximumf>, %17, %cst_6 [1] : vector<16x128xf32> to vector<16xf32>
    %19 = vector.shape_cast %18 : vector<16xf32> to vector<16x1xf32>
    %20 = vector.broadcast %19 : vector<16x1xf32> to vector<16x128xf32>
    %21 = arith.subf %5, %20 : vector<16x128xf32>
    %22 = vector.shape_cast %8 : vector<1x128xi1> to vector<1x128xi1>
    %23 = vector.broadcast %22 : vector<1x128xi1> to vector<16x128xi1>
    %24 = arith.select %23, %21, %5 : vector<16x128xi1>, vector<16x128xf32>
    %25 = math.exp %24 : vector<16x128xf32>
    %cst_7 = arith.constant 0.000000e+00 : f32
    %26 = vector.shape_cast %8 : vector<1x128xi1> to vector<1x128xi1>
    %27 = vector.broadcast %26 : vector<1x128xi1> to vector<16x128xi1>
    %28 = vector.broadcast %cst_7 : f32 to vector<16x128xf32>
    %29 = arith.select %27, %25, %28 : vector<16x128xi1>, vector<16x128xf32>
    %cst_8 = arith.constant dense<0.000000e+00> : vector<16xf32>
    %30 = vector.multi_reduction <add>, %29, %cst_8 [1] : vector<16x128xf32> to vector<16xf32>
    %31 = vector.shape_cast %30 : vector<16xf32> to vector<16x1xf32>
    %32 = tpu.reciprocal %31 : vector<16x1xf32> -> vector<16x1xf32>
    %33 = vector.broadcast %32 : vector<16x1xf32> to vector<16x128xf32>
    %34 = arith.mulf %29, %33 : vector<16x128xf32>
    %35 = vector.shape_cast %13 : vector<1x128xi1> to vector<1x128xi1>
    %36 = vector.broadcast %35 : vector<1x128xi1> to vector<16x128xi1>
    %37 = arith.select %36, %25, %5 : vector<16x128xi1>, vector<16x128xf32>
    %38 = vector.shape_cast %8 : vector<1x128xi1> to vector<1x128xi1>
    %39 = vector.broadcast %38 : vector<1x128xi1> to vector<16x128xi1>
    %40 = arith.select %39, %34, %37 : vector<16x128xi1>, vector<16x128xf32>
    %c0_9 = arith.constant 0 : index
    %c0_10 = arith.constant 0 : index
    %41 = vector.load %arg4[%c0_9, %c0_10] : memref<16x128xf32, #tpu.memory_space<vmem>>, vector<16x128xf32>
    tpu.vector_store %arg4[%c0_9, %c0_10], %40 {strides = array<i32>} : memref<16x128xf32, #tpu.memory_space<vmem>>, vector<16x128xf32>,
    return
  }
  func.func @transform_0(%arg0: i32) -> (i32, i32) {
    %c0_i32 = arith.constant 0 : i32
    %c0_i32_0 = arith.constant 0 : i32
    return %arg0, %c0_i32 : i32, i32
  }
  func.func @transform_1(%arg0: i32) -> (i32, i32) {
    %c0_i32 = arith.constant 0 : i32
    %c0_i32_0 = arith.constant 0 : i32
    %c0_i32_1 = arith.constant 0 : i32
    return %c0_i32, %c0_i32_0 : i32, i32
  }
  func.func @transform_2(%arg0: i32) -> (i32, i32) {
    %c0_i32 = arith.constant 0 : i32
    %c0_i32_0 = arith.constant 0 : i32
    %c0_i32_1 = arith.constant 0 : i32
    return %c0_i32, %c0_i32_0 : i32, i32
  }
  func.func @transform_3(%arg0: i32) -> (i32, i32) {
    %c0_i32 = arith.constant 0 : i32
    %c0_i32_0 = arith.constant 0 : i32
    return %arg0, %c0_i32 : i32, i32
  }
}

module attributes {stable_mosaic.version = 11 : i64} {
  func.func @_mdn_fused_kernel(%arg0: i32, %arg1: memref<16x32xf32, #tpu.memory_space<vmem>>, %arg2: memref<32x128xf32, #tpu.memory_space<vmem>>, %arg3: memref<1x128xf32, #tpu.memory_space<vmem>>, %arg4: memref<16x128xf32, #tpu.memory_space<vmem>>) attributes {dimension_semantics = [#tpu.dimension_semantics<parallel>], iteration_bounds = array<i64: 1>, scalar_prefetch = 0 : i64, scratch_operands = 0 : i64, tpu.core_type = #tpu.core_type<tc>, window_params = [{transform_indices = @transform_0, window_bounds = array<i64: 16, 32>}, {pipeline_mode = #tpu.pipeline_mode<synchronous>, transform_indices = @transform_1, window_bounds = array<i64: 32, 128>}, {pipeline_mode = #tpu.pipeline_mode<synchronous>, transform_indices = @transform_2, window_bounds = array<i64: 1, 128>}, {transform_indices = @transform_3, window_bounds = array<i64: 16, 128>}]} {
    %c0 = arith.constant 0 : index
    %c0_0 = arith.constant 0 : index
    %0 = vector.load %arg1[%c0, %c0_0] : memref<16x32xf32, #tpu.memory_space<vmem>>, vector<16x32xf32>
    %c0_1 = arith.constant 0 : index
    %c0_2 = arith.constant 0 : index
    %1 = vector.load %arg2[%c0_1, %c0_2] : memref<32x128xf32, #tpu.memory_space<vmem>>, vector<32x128xf32>
    %cst = arith.constant dense<0.000000e+00> : vector<16x128xf32>
    %2 = tpu.matmul %0, %1, %cst {dimension_numbers = #tpu.dot_dimension_numbers<[1], [0], [0], [1], [0, 0, 1, 1], [], []>} : vector<16x32xf32>, vector<32x128xf32>, vector<16x128xf32> -> vector<16x128xf32>
    %c0_3 = arith.constant 0 : index
    %c0_4 = arith.constant 0 : index
    %3 = vector.load %arg3[%c0_3, %c0_4] : memref<1x128xf32, #tpu.memory_space<vmem>>, vector<1x128xf32>
    %4 = vector.broadcast %3 : vector<1x128xf32> to vector<16x128xf32>
    %5 = arith.addf %2, %4 : vector<16x128xf32>
    %6 = tpu.iota {dimensions = array<i32: 1>} : vector<1x128xi32>
    %c5_i32 = arith.constant 5 : i32
    %7 = vector.broadcast %c5_i32 : i32 to vector<1x128xi32>
    %8 = arith.cmpi slt, %6, %7 : vector<1x128xi32>
    %c45_i32 = arith.constant 45 : i32
    %9 = vector.broadcast %c45_i32 : i32 to vector<1x128xi32>
    %10 = arith.cmpi sge, %6, %9 : vector<1x128xi32>
    %c85_i32 = arith.constant 85 : i32
    %11 = vector.broadcast %c85_i32 : i32 to vector<1x128xi32>
    %12 = arith.cmpi slt, %6, %11 : vector<1x128xi32>
    %13 = arith.andi %10, %12 : vector<1x128xi1>
    %cst_5 = arith.constant -1.000000e+30 : f32
    %14 = vector.shape_cast %8 : vector<1x128xi1> to vector<1x128xi1>
    %15 = vector.broadcast %14 : vector<1x128xi1> to vector<16x128xi1>
    %16 = vector.broadcast %cst_5 : f32 to vector<16x128xf32>
    %17 = arith.select %15, %5, %16 : vector<16x128xi1>, vector<16x128xf32>
    %cst_6 = arith.constant dense<0xFF800000> : vector<16xf32>
    %18 = vector.multi_reduction <maximumf>, %17, %cst_6 [1] : vector<16x128xf32> to vector<16xf32>
    %19 = vector.shape_cast %18 : vector<16xf32> to vector<16x1xf32>
    %20 = vector.broadcast %19 : vector<16x1xf32> to vector<16x128xf32>
    %21 = arith.subf %5, %20 : vector<16x128xf32>
    %22 = vector.shape_cast %8 : vector<1x128xi1> to vector<1x128xi1>
    %23 = vector.broadcast %22 : vector<1x128xi1> to vector<16x128xi1>
    %24 = arith.select %23, %21, %5 : vector<16x128xi1>, vector<16x128xf32>
    %25 = math.exp %24 : vector<16x128xf32>
    %cst_7 = arith.constant 0.000000e+00 : f32
    %26 = vector.shape_cast %8 : vector<1x128xi1> to vector<1x128xi1>
    %27 = vector.broadcast %26 : vector<1x128xi1> to vector<16x128xi1>
    %28 = vector.broadcast %cst_7 : f32 to vector<16x128xf32>
    %29 = arith.select %27, %25, %28 : vector<16x128xi1>, vector<16x128xf32>
    %cst_8 = arith.constant dense<0.000000e+00> : vector<16xf32>
    %30 = vector.multi_reduction <add>, %29, %cst_8 [1] : vector<16x128xf32> to vector<16xf32>
    %31 = vector.shape_cast %30 : vector<16xf32> to vector<16x1xf32>
    %32 = tpu.reciprocal %31 : vector<16x1xf32> -> vector<16x1xf32>
    %33 = vector.broadcast %32 : vector<16x1xf32> to vector<16x128xf32>
    %34 = arith.mulf %29, %33 : vector<16x128xf32>
    %35 = vector.shape_cast %13 : vector<1x128xi1> to vector<1x128xi1>
    %36 = vector.broadcast %35 : vector<1x128xi1> to vector<16x128xi1>
    %37 = arith.select %36, %25, %5 : vector<16x128xi1>, vector<16x128xf32>
    %38 = vector.shape_cast %8 : vector<1x128xi1> to vector<1x128xi1>
    %39 = vector.broadcast %38 : vector<1x128xi1> to vector<16x128xi1>
    %40 = arith.select %39, %34, %37 : vector<16x128xi1>, vector<16x128xf32>
    %c0_9 = arith.constant 0 : index
    %c0_10 = arith.constant 0 : index
    %41 = vector.load %arg4[%c0_9, %c0_10] : memref<16x128xf32, #tpu.memory_space<vmem>>, vector<16x128xf32>
    tpu.vector_store %arg4[%c0_9, %c0_10], %40 {strides = array<i32>} : memref<16x128xf32, #tpu.memory_space<vmem>>, vector<16x128xf32>,
    return
  }
  func.func @transform_0(%arg0: i32) -> (i32, i32) {
    %c0_i32 = arith.constant 0 : i32
    %c0_i32_0 = arith.constant 0 : i32
    return %arg0, %c0_i32 : i32, i32
  }
  func.func @transform_1(%arg0: i32) -> (i32, i32) {
    %c0_i32 = arith.constant 0 : i32
    %c0_i32_0 = arith.constant 0 : i32
    %c0_i32_1 = arith.constant 0 : i32
    return %c0_i32, %c0_i32_0 : i32, i32
  }
  func.func @transform_2(%arg0: i32) -> (i32, i32) {
    %c0_i32 = arith.constant 0 : i32
    %c0_i32_0 = arith.constant 0 : i32
    %c0_i32_1 = arith.constant 0 : i32
    return %c0_i32, %c0_i32_0 : i32, i32
  }
  func.func @transform_3(%arg0: i32) -> (i32, i32) {
    %c0_i32 = arith.constant 0 : i32
    %c0_i32_0 = arith.constant 0 : i32
    return %arg0, %c0_i32 : i32, i32
  }
}

</mosaic_0001>

<llo_original>
// kernel: tpu_custom_call.1
$region0: #{tpu_custom_call.1}
  #allocation0 [shape = 'u32[]', space=smem, size = 0x4, offset = 0x4, fixed_abs, tag = 'smem constant byte address 0x4 - core index']
  #allocation1 [shape = 'u32[144,128]{1,0:T(1,128)}', space=vmem, size = 0x12000, scoped, tag = 'internal scratch']
  %s0 = inlined_call_operand.hbm [shape: f32[16,32], index: 0, kind: input, shape index: {}]
  %s1 = inlined_call_operand.hbm [shape: f32[32,128], index: 1, kind: input, shape index: {}]
  %s2 = inlined_call_operand.vmem [shape: f32[1,128], index: 2, kind: input, shape index: {}]
  %s3 = inlined_call_operand.hbm [shape: f32[16,128], index: 3, kind: output, shape index: {}]
  %s4 = sld [smem:[#allocation0]]
  $region30: #{tpu_custom_call.1} parent=0
    _
  %s6 = ssub.s32 1, %s4
  %s7 = scalar_select 0, %s6, %s4
  $region1: #{tpu_custom_call.1} parent=0
    #allocation2 [shape = 'u8[8192]{0}', space=vmem, size = 0x2000, scoped, tag = 'input window, operand 0, single buffered']
    #allocation3 [shape = 's32[1]{0}', space=sflag, size = 0x4, scoped, tag = 'scoped memory for tpu_custom_call.1']
    #allocation4 [shape = 's32[1]{0}', space=sflag, size = 0x4, scoped, tag = 'scoped memory for tpu_custom_call.1']
    #allocation5 [shape = 'u8[16384]{0}', space=vmem, size = 0x4000, scoped, tag = 'input window, operand 1, single buffered']
    #allocation6 [shape = 's32[1]{0}', space=sflag, size = 0x4, scoped, tag = 'scoped memory for tpu_custom_call.1']
    #allocation7 [shape = 'u8[8192]{0}', space=vmem, size = 0x2000, scoped, tag = 'output window, operand 0, single buffered']
    %8 = vsyncpa [#allocation3], 0
    %9 = vsyncpa [#allocation6], 0
    %10 = vsyncpa [#allocation4], 0
    // Predicated region
    $region2: #{tpu_custom_call.1} parent=1 // pred_check
      _
    $region3: #{tpu_custom_call.1} parent=1 // pred_check_branch
      %12 = sbr.rel (0) target = $region5
    $region4: #{tpu_custom_call.1} parent=1 // pred_region
      %s14 = ssub.s32 256, 256
      %15 = vsyncadd [#allocation3], %s14
      %s16 = sshll.u32 [#allocation2], 4
      %s17 = int_to_ptr.vmem [resolvable:$true] %s16
      %22 = dma.hbm_to_vmem [thread:$0]  %s0, 256, %s17, [#allocation3], 128, 128, 8
    $region5: #{tpu_custom_call.1} parent=1 // pred_fallthru
      _
    // Predicated region
    $region6: #{tpu_custom_call.1} parent=1 // pred_check
      _
    $region7: #{tpu_custom_call.1} parent=1 // pred_check_branch
      %24 = sbr.rel (0) target = $region9
    $region8: #{tpu_custom_call.1} parent=1 // pred_region
      %s26 = ssub.s32 512, 512
      %27 = vsyncadd [#allocation6], %s26
      %s28 = sshll.u32 [#allocation5], 4
      %s29 = int_to_ptr.vmem [resolvable:$true] %s28
      %34 = dma.hbm_to_vmem [thread:$0]  %s1, 512, %s29, [#allocation6], 128, 128, 8
    $region9: #{tpu_custom_call.1} parent=1 // pred_fallthru
      _
    // Predicated region
    $region10: #{tpu_custom_call.1} parent=1 // pred_check
      _
    $region11: #{tpu_custom_call.1} parent=1 // pred_check_branch
      %36 = sbr.rel (0) target = $region13
    $region12: #{tpu_custom_call.1} parent=1 // pred_region
      _
    $region13: #{tpu_custom_call.1} parent=1 // pred_fallthru
      _
    // Predicated region
    $region14: #{tpu_custom_call.1} parent=1 // pred_check
      _
    $region15: #{tpu_custom_call.1} parent=1 // pred_check_branch
      %38 = sbr.rel (0) target = $region17
    $region16: #{tpu_custom_call.1} parent=1 // pred_region
      %39 = dma.done [#allocation3], 256
    $region17: #{tpu_custom_call.1} parent=1 // pred_fallthru
      _
    // Predicated region
    $region18: #{tpu_custom_call.1} parent=1 // pred_check
      _
    $region19: #{tpu_custom_call.1} parent=1 // pred_check_branch
      %41 = sbr.rel (0) target = $region21
    $region20: #{tpu_custom_call.1} parent=1 // pred_region
      %42 = dma.done [#allocation6], 512
    $region21: #{tpu_custom_call.1} parent=1 // pred_fallthru
      _
    %v43 = vld [vmem:[#allocation2] sm:$0xff]
    %v44 = vld [vmem:[#allocation2 + $0x8] sm:$0xff]
    %v45 = vld [vmem:[#allocation5] sm:$0xff]
    %v46 = vld [vmem:[#allocation5 + $0x8] sm:$0xff]
    %v47 = vld [vmem:[#allocation5 + $0x10] sm:$0xff]
    %v48 = vld [vmem:[#allocation5 + $0x18] sm:$0xff]
    %v49 = vld [vmem:[%s2] sm:$0x1]
    %v51 = vlaneseq
    %v52 = vshrl.u32 %v51, 7
    %v53 = vsub.s32 0, %v52
    %v54 = vrot.slane %v49, %v53
    %vm56 = vcmask 261120
    %v58 = vsel %vm56, %v43, 0
    %v61 = vsel %vm56, %v44, 0
    %63 = vmatprep.subr.mxu0 0.0
    %64 = vmatpush1.msra.mxu0 %v45
    %65 = vmatprep.subr.mxu0 0.0
    %66 = vmatpush1.msra.mxu0 %v46
    %67 = vmatprep.subr.mxu0 0.0
    %68 = vmatpush1.msra.mxu0 %v47
    %69 = vmatprep.subr.mxu0 0.0
    %70 = vmatpush1.msra.mxu0 %v48
    %71 = vmatprep.subr.mxu0 0.0
    %72 = vmatpush1.msra.mxu0 0.0
    %73 = vmatprep.subr.mxu0 0.0
    %74 = vmatpush1.msra.mxu0 0.0
    %75 = vmatprep.subr.mxu0 0.0
    %76 = vmatpush1.msra.mxu0 0.0
    %77 = vmatprep.subr.mxu0 0.0
    %78 = vmatpush1.msra.mxu0 0.0
    %79 = vmatprep.subr.mxu0 0.0
    %80 = vmatpush1.msra.mxu0 0.0
    %81 = vmatprep.subr.mxu0 0.0
    %82 = vmatpush1.msra.mxu0 0.0
    %83 = vmatprep.subr.mxu0 0.0
    %84 = vmatpush1.msra.mxu0 0.0
    %85 = vmatprep.subr.mxu0 0.0
    %86 = vmatpush1.msra.mxu0 0.0
    %87 = vmatprep.subr.mxu0 0.0
    %88 = vmatpush1.msra.mxu0 0.0
    %89 = vmatprep.subr.mxu0 0.0
    %90 = vmatpush1.msra.mxu0 0.0
    %91 = vmatprep.subr.mxu0 0.0
    %92 = vmatpush1.msra.mxu0 0.0
    %93 = vmatprep.subr.mxu0 0.0
    %94 = vmatpush1.msra.mxu0 0.0
    %95 = vmatprep.subr.mxu0 0.0
    %96 = vmatpush1.msra.mxu0 0.0
    %97 = vmatprep.subr.mxu0 0.0
    %98 = vmatpush1.msra.mxu0 0.0
    %99 = vmatprep.subr.mxu0 0.0
    %100 = vmatpush1.msra.mxu0 0.0
    %101 = vmatprep.subr.mxu0 0.0
    %102 = vmatpush1.msra.mxu0 0.0
    %103 = vmatprep.subr.mxu0 0.0
    %104 = vmatpush1.msra.mxu0 0.0
    %105 = vmatprep.subr.mxu0 0.0
    %106 = vmatpush1.msra.mxu0 0.0
    %107 = vmatprep.subr.mxu0 0.0
    %108 = vmatpush1.msra.mxu0 0.0
    %109 = vmatprep.subr.mxu0 0.0
    %110 = vmatpush1.msra.mxu0 0.0
    %111 = vmatprep.subr.mxu0 0.0
    %112 = vmatpush1.msra.mxu0 0.0
    %113 = vmatprep.subr.mxu0 0.0
    %114 = vmatpush1.msra.mxu0 0.0
    %115 = vmatprep.subr.mxu0 0.0
    %116 = vmatpush1.msra.mxu0 0.0
    %117 = vmatprep.subr.mxu0 0.0
    %118 = vmatpush1.msra.mxu0 0.0
    %119 = vmatprep.subr.mxu0 0.0
    %120 = vmatpush1.msra.mxu0 0.0
    %121 = vmatprep.subr.mxu0 0.0
    %122 = vmatpush1.msra.mxu0 0.0
    %123 = vmatprep.subr.mxu0 0.0
    %124 = vmatpush1.msra.mxu0 0.0
    %125 = vmatprep.subr.mxu0 0.0
    %126 = vmatpush1.msra.mxu0 0.0
    %127 = vmatprep.mubr.f32.mxu0 0.0
    %128 = vmatmul.mubr.f32.gmra.mrb[0].mxu0 %v58
    %v129 = vpop.f32.mrb[0].mxu0
    %v130 = vadd.f32 %v54, %v129
    %v131 = vpop.f32.mrb[0].mxu0
    %132 = vmatprep.mubr.f32.mxu0 0.0
    %133 = vmatmul.mubr.f32.gmra.mrb[0].mxu0 %v61
    %v134 = vpop.f32.mrb[0].mxu0
    %v135 = vadd.f32 %v54, %v134
    %v136 = vpop.f32.mrb[0].mxu0
    %137 = vdwg.mxu0
    %v138 = vlaneseq
    %v139 = vand.u32 %v138, 127
    %vm140 = vcmp.lt.s32.totalorder %v139, 5
    %vm141 = vcmp.ge.s32.totalorder %v139, 45
    %vm142 = vcmp.lt.s32.totalorder %v139, 85
    %vm143 = vmand %vm141, %vm142
    %v144 = vsel %vm140, 1, 0
    %vm145 = vcmp.eq.s32.totalorder %v144, 1
    %v146 = vsel %vm145, %v130, -1e+30
    %v147 = vsel %vm145, %v135, -1e+30
    %148 = vmax.xlane.f32.xlu0 %v146
    %v149 = vpop.xlane.xlu0 %148
    %150 = vmax.xlane.f32.xlu0 %v147
    %v151 = vpop.xlane.xlu0 %150
    %v152 = vsub.f32 %v130, %v149
    %v153 = vsub.f32 %v135, %v151
    %v154 = vsel %vm145, %v152, %v130
    %v155 = vsel %vm145, %v153, %v135
    %v156 = vmul.f32 %v154, 1.442695
    %v157 = vpow.pop %v156
    %v158 = vmul.f32 %v155, 1.442695
    %v159 = vpow.pop %v158
    %v160 = vsel %vm145, %v157, 0.0
    %v161 = vsel %vm145, %v159, 0.0
    %162 = vadd.xlane.f32.xlu0 %v160
    %v163 = vpop.xlane.xlu0 %162
    %164 = vadd.xlane.f32.xlu0 %v161
    %v165 = vpop.xlane.xlu0 %164
    %v166 = vrcp.pop %v163
    %v167 = vrcp.pop %v165
    %v168 = vmul.f32 %v160, %v166
    %v169 = vmul.f32 %v161, %v167
    %v170 = vsel %vm143, 1, 0
    %vm171 = vcmp.eq.s32.totalorder %v170, 1
    %v172 = vsel %vm171, %v157, %v130
    %v173 = vsel %vm171, %v159, %v135
    %v174 = vsel %vm145, %v168, %v172
    %v175 = vsel %vm145, %v169, %v173
    %176 = vst [vmem:[#allocation7] sm:$0xff] %v174
    %177 = vst [vmem:[#allocation7 + $0x8] sm:$0xff] %v175
    // Predicated region
    $region22: #{tpu_custom_call.1} parent=1 // pred_check
      _
    $region23: #{tpu_custom_call.1} parent=1 // pred_check_branch
      %179 = sbr.rel (0) target = $region25
    $region24: #{tpu_custom_call.1} parent=1 // pred_region
      %s181 = ssub.s32 256, 256
      %182 = vsyncadd [#allocation4], %s181
      %s183 = sshll.u32 [#allocation7], 4
      %s184 = int_to_ptr.vmem [resolvable:$true] %s183
      %189 = dma.vmem_to_hbm [thread:$0]  %s184, 256, %s3, [#allocation4], 128, 128, 8
    $region25: #{tpu_custom_call.1} parent=1 // pred_fallthru
      _
    // Predicated region
    $region26: #{tpu_custom_call.1} parent=1 // pred_check
      _
    $region27: #{tpu_custom_call.1} parent=1 // pred_check_branch
      %191 = sbr.rel (0) target = $region29
    $region28: #{tpu_custom_call.1} parent=1 // pred_region
      %192 = dma.done [#allocation4], 256
    $region29: #{tpu_custom_call.1} parent=1 // pred_fallthru
      _
    %193 = vsyncpa [#allocation3], 1
    %194 = vsyncpa [#allocation6], 1
    %195 = vsyncpa [#allocation4], 1

// kernel: tpu_custom_call.1
$region0: #{tpu_custom_call.1}
  #allocation0 [shape = 'u32[]', space=smem, size = 0x4, offset = 0x4, fixed_abs, tag = 'smem constant byte address 0x4 - core index']
  #allocation1 [shape = 'u32[144,128]{1,0:T(1,128)}', space=vmem, size = 0x12000, scoped, tag = 'internal scratch']
  %s0 = inlined_call_operand.hbm [shape: f32[16,32], index: 0, kind: input, shape index: {}]
  %s1 = inlined_call_operand.hbm [shape: f32[32,128], index: 1, kind: input, shape index: {}]
  %s2 = inlined_call_operand.vmem [shape: f32[1,128], index: 2, kind: input, shape index: {}]
  %s3 = inlined_call_operand.hbm [shape: f32[16,128], index: 3, kind: output, shape index: {}]
  %s4 = sld [smem:[#allocation0]]
  $region30: #{tpu_custom_call.1} parent=0
    _
  %s6 = ssub.s32 1, %s4
  %s7 = scalar_select 0, %s6, %s4
  $region1: #{tpu_custom_call.1} parent=0
    #allocation2 [shape = 'u8[8192]{0}', space=vmem, size = 0x2000, scoped, tag = 'input window, operand 0, single buffered']
    #allocation3 [shape = 's32[1]{0}', space=sflag, size = 0x4, scoped, tag = 'scoped memory for tpu_custom_call.1']
    #allocation4 [shape = 's32[1]{0}', space=sflag, size = 0x4, scoped, tag = 'scoped memory for tpu_custom_call.1']
    #allocation5 [shape = 'u8[16384]{0}', space=vmem, size = 0x4000, scoped, tag = 'input window, operand 1, single buffered']
    #allocation6 [shape = 's32[1]{0}', space=sflag, size = 0x4, scoped, tag = 'scoped memory for tpu_custom_call.1']
    #allocation7 [shape = 'u8[8192]{0}', space=vmem, size = 0x2000, scoped, tag = 'output window, operand 0, single buffered']
    %8 = vsyncpa [#allocation3], 0
    %9 = vsyncpa [#allocation6], 0
    %10 = vsyncpa [#allocation4], 0
    // Predicated region
    $region2: #{tpu_custom_call.1} parent=1 // pred_check
      _
    $region3: #{tpu_custom_call.1} parent=1 // pred_check_branch
      %12 = sbr.rel (0) target = $region5
    $region4: #{tpu_custom_call.1} parent=1 // pred_region
      %s14 = ssub.s32 256, 256
      %15 = vsyncadd [#allocation3], %s14
      %s16 = sshll.u32 [#allocation2], 4
      %s17 = int_to_ptr.vmem [resolvable:$true] %s16
      %22 = dma.hbm_to_vmem [thread:$0]  %s0, 256, %s17, [#allocation3], 128, 128, 8
    $region5: #{tpu_custom_call.1} parent=1 // pred_fallthru
      _
    // Predicated region
    $region6: #{tpu_custom_call.1} parent=1 // pred_check
      _
    $region7: #{tpu_custom_call.1} parent=1 // pred_check_branch
      %24 = sbr.rel (0) target = $region9
    $region8: #{tpu_custom_call.1} parent=1 // pred_region
      %s26 = ssub.s32 512, 512
      %27 = vsyncadd [#allocation6], %s26
      %s28 = sshll.u32 [#allocation5], 4
      %s29 = int_to_ptr.vmem [resolvable:$true] %s28
      %34 = dma.hbm_to_vmem [thread:$0]  %s1, 512, %s29, [#allocation6], 128, 128, 8
    $region9: #{tpu_custom_call.1} parent=1 // pred_fallthru
      _
    // Predicated region
    $region10: #{tpu_custom_call.1} parent=1 // pred_check
      _
    $region11: #{tpu_custom_call.1} parent=1 // pred_check_branch
      %36 = sbr.rel (0) target = $region13
    $region12: #{tpu_custom_call.1} parent=1 // pred_region
      _
    $region13: #{tpu_custom_call.1} parent=1 // pred_fallthru
      _
    // Predicated region
    $region14: #{tpu_custom_call.1} parent=1 // pred_check
      _
    $region15: #{tpu_custom_call.1} parent=1 // pred_check_branch
      %38 = sbr.rel (0) target = $region17
    $region16: #{tpu_custom_call.1} parent=1 // pred_region
      %39 = dma.done [#allocation3], 256
    $region17: #{tpu_custom_call.1} parent=1 // pred_fallthru
      _
    // Predicated region
    $region18: #{tpu_custom_call.1} parent=1 // pred_check
      _
    $region19: #{tpu_custom_call.1} parent=1 // pred_check_branch
      %41 = sbr.rel (0) target = $region21
    $region20: #{tpu_custom_call.1} parent=1 // pred_region
      %42 = dma.done [#allocation6], 512
    $region21: #{tpu_custom_call.1} parent=1 // pred_fallthru
      _
    %v43 = vld [vmem:[#allocation2] sm:$0xff]
    %v44 = vld [vmem:[#allocation2 + $0x8] sm:$0xff]
    %v45 = vld [vmem:[#allocation5] sm:$0xff]
    %v46 = vld [vmem:[#allocation5 + $0x8] sm:$0xff]
    %v47 = vld [vmem:[#allocation5 + $0x10] sm:$0xff]
    %v48 = vld [vmem:[#allocation5 + $0x18] sm:$0xff]
    %v49 = vld [vmem:[%s2] sm:$0x1]
    %v51 = vlaneseq
    %v52 = vshrl.u32 %v51, 7
    %v53 = vsub.s32 0, %v52
    %v54 = vrot.slane %v49, %v53
    %vm56 = vcmask 261120
    %v58 = vsel %vm56, %v43, 0
    %v61 = vsel %vm56, %v44, 0
    %63 = vmatprep.subr.mxu0 0.0
    %64 = vmatpush1.msra.mxu0 %v45
    %65 = vmatprep.subr.mxu0 0.0
    %66 = vmatpush1.msra.mxu0 %v46
    %67 = vmatprep.subr.mxu0 0.0
    %68 = vmatpush1.msra.mxu0 %v47
    %69 = vmatprep.subr.mxu0 0.0
    %70 = vmatpush1.msra.mxu0 %v48
    %71 = vmatprep.subr.mxu0 0.0
    %72 = vmatpush1.msra.mxu0 0.0
    %73 = vmatprep.subr.mxu0 0.0
    %74 = vmatpush1.msra.mxu0 0.0
    %75 = vmatprep.subr.mxu0 0.0
    %76 = vmatpush1.msra.mxu0 0.0
    %77 = vmatprep.subr.mxu0 0.0
    %78 = vmatpush1.msra.mxu0 0.0
    %79 = vmatprep.subr.mxu0 0.0
    %80 = vmatpush1.msra.mxu0 0.0
    %81 = vmatprep.subr.mxu0 0.0
    %82 = vmatpush1.msra.mxu0 0.0
    %83 = vmatprep.subr.mxu0 0.0
    %84 = vmatpush1.msra.mxu0 0.0
    %85 = vmatprep.subr.mxu0 0.0
    %86 = vmatpush1.msra.mxu0 0.0
    %87 = vmatprep.subr.mxu0 0.0
    %88 = vmatpush1.msra.mxu0 0.0
    %89 = vmatprep.subr.mxu0 0.0
    %90 = vmatpush1.msra.mxu0 0.0
    %91 = vmatprep.subr.mxu0 0.0
    %92 = vmatpush1.msra.mxu0 0.0
    %93 = vmatprep.subr.mxu0 0.0
    %94 = vmatpush1.msra.mxu0 0.0
    %95 = vmatprep.subr.mxu0 0.0
    %96 = vmatpush1.msra.mxu0 0.0
    %97 = vmatprep.subr.mxu0 0.0
    %98 = vmatpush1.msra.mxu0 0.0
    %99 = vmatprep.subr.mxu0 0.0
    %100 = vmatpush1.msra.mxu0 0.0
    %101 = vmatprep.subr.mxu0 0.0
    %102 = vmatpush1.msra.mxu0 0.0
    %103 = vmatprep.subr.mxu0 0.0
    %104 = vmatpush1.msra.mxu0 0.0
    %105 = vmatprep.subr.mxu0 0.0
    %106 = vmatpush1.msra.mxu0 0.0
    %107 = vmatprep.subr.mxu0 0.0
    %108 = vmatpush1.msra.mxu0 0.0
    %109 = vmatprep.subr.mxu0 0.0
    %110 = vmatpush1.msra.mxu0 0.0
    %111 = vmatprep.subr.mxu0 0.0
    %112 = vmatpush1.msra.mxu0 0.0
    %113 = vmatprep.subr.mxu0 0.0
    %114 = vmatpush1.msra.mxu0 0.0
    %115 = vmatprep.subr.mxu0 0.0
    %116 = vmatpush1.msra.mxu0 0.0
    %117 = vmatprep.subr.mxu0 0.0
    %118 = vmatpush1.msra.mxu0 0.0
    %119 = vmatprep.subr.mxu0 0.0
    %120 = vmatpush1.msra.mxu0 0.0
    %121 = vmatprep.subr.mxu0 0.0
    %122 = vmatpush1.msra.mxu0 0.0
    %123 = vmatprep.subr.mxu0 0.0
    %124 = vmatpush1.msra.mxu0 0.0
    %125 = vmatprep.subr.mxu0 0.0
    %126 = vmatpush1.msra.mxu0 0.0
    %127 = vmatprep.mubr.f32.mxu0 0.0
    %128 = vmatmul.mubr.f32.gmra.mrb[0].mxu0 %v58
    %v129 = vpop.f32.mrb[0].mxu0
    %v130 = vadd.f32 %v54, %v129
    %v131 = vpop.f32.mrb[0].mxu0
    %132 = vmatprep.mubr.f32.mxu0 0.0
    %133 = vmatmul.mubr.f32.gmra.mrb[0].mxu0 %v61
    %v134 = vpop.f32.mrb[0].mxu0
    %v135 = vadd.f32 %v54, %v134
    %v136 = vpop.f32.mrb[0].mxu0
    %137 = vdwg.mxu0
    %v138 = vlaneseq
    %v139 = vand.u32 %v138, 127
    %vm140 = vcmp.lt.s32.totalorder %v139, 5
    %vm141 = vcmp.ge.s32.totalorder %v139, 45
    %vm142 = vcmp.lt.s32.totalorder %v139, 85
    %vm143 = vmand %vm141, %vm142
    %v144 = vsel %vm140, 1, 0
    %vm145 = vcmp.eq.s32.totalorder %v144, 1
    %v146 = vsel %vm145, %v130, -1e+30
    %v147 = vsel %vm145, %v135, -1e+30
    %148 = vmax.xlane.f32.xlu0 %v146
    %v149 = vpop.xlane.xlu0 %148
    %150 = vmax.xlane.f32.xlu0 %v147
    %v151 = vpop.xlane.xlu0 %150
    %v152 = vsub.f32 %v130, %v149
    %v153 = vsub.f32 %v135, %v151
    %v154 = vsel %vm145, %v152, %v130
    %v155 = vsel %vm145, %v153, %v135
    %v156 = vmul.f32 %v154, 1.442695
    %v157 = vpow.pop %v156
    %v158 = vmul.f32 %v155, 1.442695
    %v159 = vpow.pop %v158
    %v160 = vsel %vm145, %v157, 0.0
    %v161 = vsel %vm145, %v159, 0.0
    %162 = vadd.xlane.f32.xlu0 %v160
    %v163 = vpop.xlane.xlu0 %162
    %164 = vadd.xlane.f32.xlu0 %v161
    %v165 = vpop.xlane.xlu0 %164
    %v166 = vrcp.pop %v163
    %v167 = vrcp.pop %v165
    %v168 = vmul.f32 %v160, %v166
    %v169 = vmul.f32 %v161, %v167
    %v170 = vsel %vm143, 1, 0
    %vm171 = vcmp.eq.s32.totalorder %v170, 1
    %v172 = vsel %vm171, %v157, %v130
    %v173 = vsel %vm171, %v159, %v135
    %v174 = vsel %vm145, %v168, %v172
    %v175 = vsel %vm145, %v169, %v173
    %176 = vst [vmem:[#allocation7] sm:$0xff] %v174
    %177 = vst [vmem:[#allocation7 + $0x8] sm:$0xff] %v175
    // Predicated region
    $region22: #{tpu_custom_call.1} parent=1 // pred_check
      _
    $region23: #{tpu_custom_call.1} parent=1 // pred_check_branch
      %179 = sbr.rel (0) target = $region25
    $region24: #{tpu_custom_call.1} parent=1 // pred_region
      %s181 = ssub.s32 256, 256
      %182 = vsyncadd [#allocation4], %s181
      %s183 = sshll.u32 [#allocation7], 4
      %s184 = int_to_ptr.vmem [resolvable:$true] %s183
      %189 = dma.vmem_to_hbm [thread:$0]  %s184, 256, %s3, [#allocation4], 128, 128, 8
    $region25: #{tpu_custom_call.1} parent=1 // pred_fallthru
      _
    // Predicated region
    $region26: #{tpu_custom_call.1} parent=1 // pred_check
      _
    $region27: #{tpu_custom_call.1} parent=1 // pred_check_branch
      %191 = sbr.rel (0) target = $region29
    $region28: #{tpu_custom_call.1} parent=1 // pred_region
      %192 = dma.done [#allocation4], 256
    $region29: #{tpu_custom_call.1} parent=1 // pred_fallthru
      _
    %193 = vsyncpa [#allocation3], 1
    %194 = vsyncpa [#allocation6], 1
    %195 = vsyncpa [#allocation4], 1

</llo_original>
